<compile_context>
chip_gen: v5e
topology: v5e:2x2
jax: 0.10.0
libtpu: 0.0.40
codegen_flags: <defaults>
</compile_context>

<pallas_src>
import jax
import jax.numpy as jnp
from jax.experimental import pallas as pl
from jax.experimental.pallas import tpu as pltpu


# ---------------------------------------------------------------------------
# Kernel
# ---------------------------------------------------------------------------
def _attention_kernel(enc_ref, dec_ref, we_ref, wd_ref, bsum_ref, wf_ref,
                      mask_ref, ctx_ref, alpha_ref):
    # enc_ref:   (TB, Np, E)  matmul dtype (bf16 by default)
    # dec_ref:   (TB, D)      matmul dtype
    # we_ref:    (E, A)       matmul dtype
    # wd_ref:    (D, A)       matmul dtype
    # bsum_ref:  (1, A)  f32  (= b_enc + b_dec, folded in the wrapper)
    # wf_ref:    (1, A)  f32  (full_att weight as a row)
    # mask_ref:  (1, Np) f32  (0 at valid regions, -1e30 at N-padding)
    # ctx_ref:   (TB, E) f32  alpha_ref: (TB, Np) f32 (lane-dense)
    TB, Np, E = enc_ref.shape
    A = we_ref.shape[1]

    enc = enc_ref[...]                                           # (TB, Np, E)

    # ---- encoder / decoder projections: two MXU matmuls, f32 accumulation.
    enc2d = enc.reshape(TB * Np, E)                              # relayout-free (Np % 8 == 0)
    att1 = jnp.dot(enc2d, we_ref[...],
                   preferred_element_type=jnp.float32)           # (TB*Np, A)
    att2 = jnp.dot(dec_ref[...], wd_ref[...],
                   preferred_element_type=jnp.float32)           # (TB, A)

    # ReLU(att1 + att2 + (b_e + b_d))  -- both Linear biases folded, f32 VPU.
    h = jnp.maximum(att1.reshape(TB, Np, A)
                    + (att2 + bsum_ref[...])[:, None, :], 0.0)   # (TB, Np, A)

    # ---- full_att (A -> 1): VPU multiply + lane reduce (MXU stays free).
    att = jnp.sum(h * wf_ref[...][None, :, :], axis=-1)          # (TB, Np)
    att = att + mask_ref[...]                                    # mask padded regions

    # ---- softmax over the N regions (lane axis). Exact divide so rows sum to 1.
    m = jnp.max(att, axis=-1, keepdims=True)                     # (TB, 1)
    e = jnp.exp(att - m)
    s = jnp.sum(e, axis=-1, keepdims=True)
    alpha = e / s                                                # (TB, Np)

    # ---- context = alpha-weighted sum of regions: VPU multiply + reduce over N.
    ctx = jnp.sum(enc.astype(jnp.float32) * alpha[:, :, None], axis=1)   # (TB, E)

    ctx_ref[...] = ctx.astype(ctx_ref.dtype)
    alpha_ref[...] = alpha.astype(alpha_ref.dtype)


# ---------------------------------------------------------------------------
# Generation-aware sizing helpers
# ---------------------------------------------------------------------------
def _vmem_budgets():
    """(per-grid-step VMEM budget, vmem_limit_bytes) per TPU generation."""
    kind = ""
    try:
        kind = jax.devices()[0].device_kind.lower()
    except Exception:
        pass
    if ("v7" in kind) or ("7x" in kind):
        # v7x: 64 MiB physical VMEM -> smaller per-step budget, <=48 MiB limit.
        return 12 * 1024 * 1024, 48 * 1024 * 1024
    # v5e / v6e: 128 MiB physical VMEM -> bigger blocks amortize per-step overhead.
    return 24 * 1024 * 1024, 64 * 1024 * 1024


def _choose_block_b(B, Np, E, D, A, matmul_dtype, budget_bytes):
    # Aim for ~256 rows feeding the (TB*Np, E) @ (E, A) matmul (one full MXU pass
    # on v6e/v7x, more than enough for v5e's 128-wide MXU).
    tb = max(1, 256 // max(Np, 1))

    # Per-batch-element VMEM of one grid step: double-buffered streamed blocks
    # plus the compiler-managed f32 intermediates (att1 / h / exp / f32 enc copy).
    in_bytes = jnp.dtype(matmul_dtype).itemsize
    per_b = (2 * (Np * E + D) * in_bytes        # enc + dec input blocks, x2 buffers
             + 2 * (E + Np) * 4                 # ctx + alpha output blocks, x2 buffers
             + 3 * Np * A * 4                   # att1 / h / exp intermediates (f32)
             + Np * E * 4)                      # f32 copy of enc for the context sum
    tb = min(tb, max(1, budget_bytes // max(per_b, 1)))

    # Keep at least 2 grid steps so both v7x TensorCores get work and the DMA
    # pipeline has something to overlap with.
    if B >= 16:
        tb = min(tb, B // 2)

    return max(8, (tb // 8) * 8)                # sublane-aligned


# ---------------------------------------------------------------------------
# Wrapper
# ---------------------------------------------------------------------------
def attention_forward(encoder_out, decoder_hidden, params, *, block_b=None,
                      matmul_dtype=jnp.bfloat16):
    """encoder_out: (B, N, E), decoder_hidden: (1, B, D).

    Returns (context (B, E), alpha (B, N)).
    matmul_dtype controls the MXU operand dtype (bf16 default, f32 accumulation);
    all elementwise / softmax math runs in f32 regardless.
    """
    W_e, b_e, W_d, b_d, W_f, b_f = params
    B, N, E = encoder_out.shape
    D = decoder_hidden.shape[-1]
    A = W_e.shape[1]

    dec = jnp.squeeze(decoder_hidden, axis=0)                      # (B, D)

    # Fold the two Linear biases; drop b_f entirely (cancels in the softmax).
    b_sum = (b_e + b_d).reshape(1, A).astype(jnp.float32)
    wf_row = W_f.reshape(1, A).astype(jnp.float32)

    # Cast matmul operands once here: bf16 MXU path + halved encoder_out HBM stream.
    enc_in = encoder_out.astype(matmul_dtype)
    dec_in = dec.astype(matmul_dtype)
    w_e = W_e.astype(matmul_dtype)
    w_d = W_d.astype(matmul_dtype)

    # Pad the region axis to a sublane multiple (relayout-free reshapes in-kernel);
    # padded logits are masked to -1e30 so they get zero softmax mass.
    Np = max(8, ((N + 7) // 8) * 8)
    if Np != N:
        enc_in = jnp.pad(enc_in, ((0, 0), (0, Np - N), (0, 0)))
    n_mask = jnp.where(jnp.arange(Np) < N, 0.0, -1e30)
    n_mask = n_mask.reshape(1, Np).astype(jnp.float32)

    # ---- batch tile selection (generation aware) ---------------------------
    budget_bytes, vmem_limit = _vmem_budgets()
    if block_b is None:
        block_b = _choose_block_b(B, Np, E, D, A, matmul_dtype, budget_bytes)
    TB = max(8, (block_b // 8) * 8)

    # Pad the batch so the grid tiles evenly (padded rows are sliced off).
    Bp = ((B + TB - 1) // TB) * TB
    if Bp != B:
        pad = Bp - B
        enc_in = jnp.pad(enc_in, ((0, pad), (0, 0), (0, 0)))
        dec_in = jnp.pad(dec_in, ((0, pad), (0, 0)))

    ctx, alpha = pl.pallas_call(
        _attention_kernel,
        out_shape=(
            jax.ShapeDtypeStruct((Bp, E), jnp.float32),
            jax.ShapeDtypeStruct((Bp, Np), jnp.float32),
        ),
        grid_spec=pltpu.PrefetchScalarGridSpec(
            num_scalar_prefetch=0,
            grid=(Bp // TB,),
            in_specs=[
                pl.BlockSpec((TB, Np, E), lambda b: (b, 0, 0)),   # encoder_out block
                pl.BlockSpec((TB, D),     lambda b: (b, 0)),      # decoder hidden block
                pl.BlockSpec((E, A),      lambda b: (0, 0)),      # W_enc (resident)
                pl.BlockSpec((D, A),      lambda b: (0, 0)),      # W_dec (resident)
                pl.BlockSpec((1, A),      lambda b: (0, 0)),      # b_enc + b_dec
                pl.BlockSpec((1, A),      lambda b: (0, 0)),      # W_full as row
                pl.BlockSpec((1, Np),     lambda b: (0, 0)),      # region-pad mask
            ],
            out_specs=[
                pl.BlockSpec((TB, E),  lambda b: (b, 0)),         # context
                pl.BlockSpec((TB, Np), lambda b: (b, 0)),         # alpha (lane-dense)
            ],
        ),
        compiler_params=pltpu.CompilerParams(
            dimension_semantics=("parallel",),
            vmem_limit_bytes=vmem_limit,
        ),
    )(enc_in, dec_in, w_e, w_d, b_sum, wf_row, n_mask)

    return ctx[:B].astype(encoder_out.dtype), alpha[:B, :N]


# ---------------------------------------------------------------------------
# Reference + init
# ---------------------------------------------------------------------------
def _reference(encoder_out, decoder_hidden, params):
    W_e, b_e, W_d, b_d, W_f, b_f = params
    att1 = encoder_out @ W_e + b_e                                  # (B, N, A)
    att2 = jnp.squeeze(decoder_hidden, 0) @ W_d + b_d               # (B, A)
    att = (jnp.maximum(att1 + att2[:, None, :], 0.0) @ W_f + b_f)[..., 0]
    alpha = jax.nn.softmax(att, axis=1)
    context = jnp.sum(encoder_out * alpha[..., None], axis=1)
    return context, alpha


def init_params(key, encoder_dim, decoder_dim, attention_dim):
    # torch.nn.Linear-style init: U(-1/sqrt(fan_in), 1/sqrt(fan_in)).
    ks = jax.random.split(key, 6)

    def lin(kw, kb, fan_in, fan_out):
        bound = 1.0 / jnp.sqrt(fan_in)
        W = jax.random.uniform(kw, (fan_in, fan_out), jnp.float32, -bound, bound)
        b = jax.random.uniform(kb, (fan_out,), jnp.float32, -bound, bound)
        return W, b

    W_e, b_e = lin(ks[0], ks[1], encoder_dim, attention_dim)
    W_d, b_d = lin(ks[2], ks[3], decoder_dim, attention_dim)
    W_f, b_f = lin(ks[4], ks[5], attention_dim, 1)
    return (W_e, b_e, W_d, b_d, W_f, b_f)


if __name__ == "__main__":
    B, N = 16, 8
    encoder_dim, decoder_dim, attention_dim = 32, 16, 32

    key = jax.random.PRNGKey(0)
    k_enc, k_dec, k_par = jax.random.split(key, 3)

    encoder_out = jax.random.normal(k_enc, (B, N, encoder_dim), jnp.float32)
    decoder_hidden = jax.random.normal(k_dec, (1, B, decoder_dim), jnp.float32)
    params = init_params(k_par, encoder_dim, decoder_dim, attention_dim)

    ctx_ref, alpha_ref = _reference(encoder_out, decoder_hidden, params)

    # 1) f32 MXU path: tight numerical check of the kernel structure.
    ctx32, alpha32 = attention_forward(encoder_out, decoder_hidden, params,
                                       matmul_dtype=jnp.float32)
    jax.block_until_ready((ctx32, alpha32))
    assert jnp.allclose(alpha32, alpha_ref, atol=1e-4, rtol=1e-4)
    assert jnp.allclose(ctx32, ctx_ref, atol=1e-4, rtol=1e-4)
    assert jnp.allclose(jnp.sum(alpha32, axis=-1), 1.0, atol=1e-5)

    # 2) default bf16 MXU path (f32 accumulation, f32 softmax): looser tolerance,
    #    but alpha rows still sum to 1 exactly (softmax is exact in f32).
    ctx, alpha = attention_forward(encoder_out, decoder_hidden, params)
    jax.block_until_ready((ctx, alpha))
    assert jnp.allclose(alpha, alpha_ref, atol=5e-2, rtol=5e-2)
    assert jnp.allclose(ctx, ctx_ref, atol=5e-2, rtol=5e-2)
    assert jnp.allclose(jnp.sum(alpha, axis=-1), 1.0, atol=1e-5)

    print("KERNEL_OK")
</pallas_src>

<mosaic_0001>
module attributes {stable_mosaic.version = 11 : i64} {
  func.func @_attention_kernel(%arg0: i32, %arg1: memref<8x8x32xf32, #tpu.memory_space<vmem>>, %arg2: memref<8x16xf32, #tpu.memory_space<vmem>>, %arg3: memref<32x32xf32, #tpu.memory_space<vmem>>, %arg4: memref<16x32xf32, #tpu.memory_space<vmem>>, %arg5: memref<1x32xf32, #tpu.memory_space<vmem>>, %arg6: memref<1x32xf32, #tpu.memory_space<vmem>>, %arg7: memref<1x8xf32, #tpu.memory_space<vmem>>, %arg8: memref<8x32xf32, #tpu.memory_space<vmem>>, %arg9: memref<8x8xf32, #tpu.memory_space<vmem>>) attributes {dimension_semantics = [#tpu.dimension_semantics<parallel>], iteration_bounds = array<i64: 2>, scalar_prefetch = 0 : i64, scratch_operands = 0 : i64, tpu.core_type = #tpu.core_type<tc>, window_params = [{transform_indices = @transform_0, window_bounds = array<i64: 8, 8, 32>}, {transform_indices = @transform_1, window_bounds = array<i64: 8, 16>}, {pipeline_mode = #tpu.pipeline_mode<synchronous>, transform_indices = @transform_2, window_bounds = array<i64: 32, 32>}, {pipeline_mode = #tpu.pipeline_mode<synchronous>, transform_indices = @transform_3, window_bounds = array<i64: 16, 32>}, {pipeline_mode = #tpu.pipeline_mode<synchronous>, transform_indices = @transform_4, window_bounds = array<i64: 1, 32>}, {pipeline_mode = #tpu.pipeline_mode<synchronous>, transform_indices = @transform_5, window_bounds = array<i64: 1, 32>}, {pipeline_mode = #tpu.pipeline_mode<synchronous>, transform_indices = @transform_6, window_bounds = array<i64: 1, 8>}, {transform_indices = @transform_7, window_bounds = array<i64: 8, 32>}, {transform_indices = @transform_8, window_bounds = array<i64: 8, 8>}]} {
    %c0 = arith.constant 0 : index
    %c0_0 = arith.constant 0 : index
    %c0_1 = arith.constant 0 : index
    %0 = vector.load %arg1[%c0, %c0_0, %c0_1] : memref<8x8x32xf32, #tpu.memory_space<vmem>>, vector<8x8x32xf32>
    %1 = vector.shape_cast %0 : vector<8x8x32xf32> to vector<64x32xf32>
    %c0_2 = arith.constant 0 : index
    %c0_3 = arith.constant 0 : index
    %2 = vector.load %arg3[%c0_2, %c0_3] : memref<32x32xf32, #tpu.memory_space<vmem>>, vector<32x32xf32>
    %cst = arith.constant dense<0.000000e+00> : vector<64x32xf32>
    %3 = tpu.matmul %1, %2, %cst {dimension_numbers = #tpu.dot_dimension_numbers<[1], [0], [0], [1], [0, 0, 1, 1], [], []>} : vector<64x32xf32>, vector<32x32xf32>, vector<64x32xf32> -> vector<64x32xf32>
    %c0_4 = arith.constant 0 : index
    %c0_5 = arith.constant 0 : index
    %4 = vector.load %arg2[%c0_4, %c0_5] : memref<8x16xf32, #tpu.memory_space<vmem>>, vector<8x16xf32>
    %c0_6 = arith.constant 0 : index
    %c0_7 = arith.constant 0 : index
    %5 = vector.load %arg4[%c0_6, %c0_7] : memref<16x32xf32, #tpu.memory_space<vmem>>, vector<16x32xf32>
    %cst_8 = arith.constant dense<0.000000e+00> : vector<8x32xf32>
    %6 = tpu.matmul %4, %5, %cst_8 {dimension_numbers = #tpu.dot_dimension_numbers<[1], [0], [0], [1], [0, 0, 1, 1], [], []>} : vector<8x16xf32>, vector<16x32xf32>, vector<8x32xf32> -> vector<8x32xf32>
    %7 = vector.shape_cast %3 : vector<64x32xf32> to vector<8x8x32xf32>
    %c0_9 = arith.constant 0 : index
    %c0_10 = arith.constant 0 : index
    %8 = vector.load %arg5[%c0_9, %c0_10] : memref<1x32xf32, #tpu.memory_space<vmem>>, vector<1x32xf32>
    %9 = vector.broadcast %8 : vector<1x32xf32> to vector<8x32xf32>
    %10 = arith.addf %6, %9 : vector<8x32xf32>
    %11 = vector.shape_cast %10 : vector<8x32xf32> to vector<8x1x32xf32>
    %12 = vector.broadcast %11 : vector<8x1x32xf32> to vector<8x8x32xf32>
    %13 = arith.addf %7, %12 : vector<8x8x32xf32>
    %cst_11 = arith.constant 0.000000e+00 : f32
    %14 = vector.broadcast %cst_11 : f32 to vector<8x8x32xf32>
    %15 = arith.maximumf %13, %14 : vector<8x8x32xf32>
    %c0_12 = arith.constant 0 : index
    %c0_13 = arith.constant 0 : index
    %16 = vector.load %arg6[%c0_12, %c0_13] : memref<1x32xf32, #tpu.memory_space<vmem>>, vector<1x32xf32>
    %17 = vector.shape_cast %16 : vector<1x32xf32> to vector<1x1x32xf32>
    %18 = vector.broadcast %17 : vector<1x1x32xf32> to vector<8x8x32xf32>
    %19 = arith.mulf %15, %18 : vector<8x8x32xf32>
    %cst_14 = arith.constant dense<0.000000e+00> : vector<8x8xf32>
    %20 = vector.multi_reduction <add>, %19, %cst_14 [2] : vector<8x8x32xf32> to vector<8x8xf32>
    %c0_15 = arith.constant 0 : index
    %c0_16 = arith.constant 0 : index
    %21 = vector.load %arg7[%c0_15, %c0_16] : memref<1x8xf32, #tpu.memory_space<vmem>>, vector<1x8xf32>
    %22 = vector.broadcast %21 : vector<1x8xf32> to vector<8x8xf32>
    %23 = arith.addf %20, %22 : vector<8x8xf32>
    %cst_17 = arith.constant dense<0xFF800000> : vector<8xf32>
    %24 = vector.multi_reduction <maximumf>, %23, %cst_17 [1] : vector<8x8xf32> to vector<8xf32>
    %25 = vector.shape_cast %24 : vector<8xf32> to vector<8x1xf32>
    %26 = vector.broadcast %25 : vector<8x1xf32> to vector<8x8xf32>
    %27 = arith.subf %23, %26 : vector<8x8xf32>
    %28 = math.exp %27 : vector<8x8xf32>
    %cst_18 = arith.constant dense<0.000000e+00> : vector<8xf32>
    %29 = vector.multi_reduction <add>, %28, %cst_18 [1] : vector<8x8xf32> to vector<8xf32>
    %30 = vector.shape_cast %29 : vector<8xf32> to vector<8x1xf32>
    %31 = vector.broadcast %30 : vector<8x1xf32> to vector<8x8xf32>
    %32 = arith.divf %28, %31 : vector<8x8xf32>
    %33 = vector.shape_cast %32 : vector<8x8xf32> to vector<8x8x1xf32>
    %34 = vector.broadcast %33 : vector<8x8x1xf32> to vector<8x8x32xf32>
    %35 = arith.mulf %0, %34 : vector<8x8x32xf32>
    %cst_19 = arith.constant dense<0.000000e+00> : vector<8x32xf32>
    %36 = vector.multi_reduction <add>, %35, %cst_19 [1] : vector<8x8x32xf32> to vector<8x32xf32>
    %c0_20 = arith.constant 0 : index
    %c0_21 = arith.constant 0 : index
    %37 = vector.load %arg8[%c0_20, %c0_21] : memref<8x32xf32, #tpu.memory_space<vmem>>, vector<8x32xf32>
    tpu.vector_store %arg8[%c0_20, %c0_21], %36 {strides = array<i32>} : memref<8x32xf32, #tpu.memory_space<vmem>>, vector<8x32xf32>,
    %c0_22 = arith.constant 0 : index
    %c0_23 = arith.constant 0 : index
    %38 = vector.load %arg9[%c0_22, %c0_23] : memref<8x8xf32, #tpu.memory_space<vmem>>, vector<8x8xf32>
    tpu.vector_store %arg9[%c0_22, %c0_23], %32 {strides = array<i32>} : memref<8x8xf32, #tpu.memory_space<vmem>>, vector<8x8xf32>,
    return
  }
  func.func @transform_0(%arg0: i32) -> (i32, i32, i32) {
    %c0_i32 = arith.constant 0 : i32
    %c0_i32_0 = arith.constant 0 : i32
    %c0_i32_1 = arith.constant 0 : i32
    return %arg0, %c0_i32, %c0_i32_0 : i32, i32, i32
  }
  func.func @transform_1(%arg0: i32) -> (i32, i32) {
    %c0_i32 = arith.constant 0 : i32
    %c0_i32_0 = arith.constant 0 : i32
    return %arg0, %c0_i32 : i32, i32
  }
  func.func @transform_2(%arg0: i32) -> (i32, i32) {
    %c0_i32 = arith.constant 0 : i32
    %c0_i32_0 = arith.constant 0 : i32
    %c0_i32_1 = arith.constant 0 : i32
    return %c0_i32, %c0_i32_0 : i32, i32
  }
  func.func @transform_3(%arg0: i32) -> (i32, i32) {
    %c0_i32 = arith.constant 0 : i32
    %c0_i32_0 = arith.constant 0 : i32
    %c0_i32_1 = arith.constant 0 : i32
    return %c0_i32, %c0_i32_0 : i32, i32
  }
  func.func @transform_4(%arg0: i32) -> (i32, i32) {
    %c0_i32 = arith.constant 0 : i32
    %c0_i32_0 = arith.constant 0 : i32
    %c0_i32_1 = arith.constant 0 : i32
    return %c0_i32, %c0_i32_0 : i32, i32
  }
  func.func @transform_5(%arg0: i32) -> (i32, i32) {
    %c0_i32 = arith.constant 0 : i32
    %c0_i32_0 = arith.constant 0 : i32
    %c0_i32_1 = arith.constant 0 : i32
    return %c0_i32, %c0_i32_0 : i32, i32
  }
  func.func @transform_6(%arg0: i32) -> (i32, i32) {
    %c0_i32 = arith.constant 0 : i32
    %c0_i32_0 = arith.constant 0 : i32
    %c0_i32_1 = arith.constant 0 : i32
    return %c0_i32, %c0_i32_0 : i32, i32
  }
  func.func @transform_7(%arg0: i32) -> (i32, i32) {
    %c0_i32 = arith.constant 0 : i32
    %c0_i32_0 = arith.constant 0 : i32
    return %arg0, %c0_i32 : i32, i32
  }
  func.func @transform_8(%arg0: i32) -> (i32, i32) {
    %c0_i32 = arith.constant 0 : i32
    %c0_i32_0 = arith.constant 0 : i32
    return %arg0, %c0_i32 : i32, i32
  }
}

</mosaic_0001>

<llo_original>
// kernel: tpu_custom_call.1
$region0: #{tpu_custom_call.1}
  #allocation0 [shape = 'u32[]', space=smem, size = 0x4, offset = 0x4, fixed_abs, tag = 'smem constant byte address 0x4 - core index']
  #allocation1 [shape = 'u32[72,128]{1,0:T(1,128)}', space=vmem, size = 0x9000, scoped, tag = 'internal scratch']
  %s0 = inlined_call_operand.hbm [shape: f32[16,8,32], index: 0, kind: input, shape index: {}]
  %s1 = inlined_call_operand.hbm [shape: f32[16,16], index: 1, kind: input, shape index: {}]
  %s2 = inlined_call_operand.hbm [shape: f32[32,32], index: 2, kind: input, shape index: {}]
  %s3 = inlined_call_operand.hbm [shape: f32[16,32], index: 3, kind: input, shape index: {}]
  %s4 = inlined_call_operand.vmem [shape: f32[1,32], index: 4, kind: input, shape index: {}]
  %s5 = inlined_call_operand.vmem [shape: f32[1,32], index: 5, kind: input, shape index: {}]
  %s6 = inlined_call_operand.vmem [shape: f32[1,8], index: 6, kind: input, shape index: {}]
  %s7 = inlined_call_operand.hbm [shape: f32[16,32], index: 7, kind: output, shape index: {0}]
  %s8 = inlined_call_operand.vmem [shape: f32[16,8], index: 8, kind: output, shape index: {1}]
  %9 = xla_tuple %s7, %s8
  %s10 = sld [smem:[#allocation0]]
  $region85: #{tpu_custom_call.1} parent=0
    _
  %s12 = ssub.s32 1, %s10
  %s13 = scalar_select 0, %s12, %s10
  $region1: #{tpu_custom_call.1} parent=0
    #allocation2 [shape = 'u8[65536]{0}', space=vmem, size = 0x10000, scoped, tag = 'input window, operand 0']
    #allocation3 [shape = 's32[2]{0}', space=sflag, size = 0x8, scoped, tag = 'scoped memory for tpu_custom_call.1']
    #allocation4 [shape = 's32[2]{0}', space=sflag, size = 0x8, scoped, tag = 'scoped memory for tpu_custom_call.1']
    #allocation5 [shape = 'u8[8192]{0}', space=vmem, size = 0x2000, scoped, tag = 'input window, operand 1']
    #allocation6 [shape = 's32[2]{0}', space=sflag, size = 0x8, scoped, tag = 'scoped memory for tpu_custom_call.1']
    #allocation7 [shape = 'u8[16384]{0}', space=vmem, size = 0x4000, scoped, tag = 'input window, operand 2, single buffered']
    #allocation8 [shape = 'u8[8192]{0}', space=vmem, size = 0x2000, scoped, tag = 'input window, operand 3, single buffered']
    #allocation9 [shape = 's32[1]{0}', space=sflag, size = 0x4, scoped, tag = 'scoped memory for tpu_custom_call.1']
    #allocation10 [shape = 'u8[8192]{0}', space=vmem, size = 0x2000, scoped, tag = 'output window, operand 0']
    %14 = vsyncpa [#allocation3], 0
    %s15 = scalar_lea.sflag [#allocation3], 1
    %16 = vsyncpa %s15, 0
    %17 = vsyncpa [#allocation6], 0
    %s18 = scalar_lea.sflag [#allocation6], 1
    %19 = vsyncpa %s18, 0
    %20 = vsyncpa [#allocation9], 0
    %21 = vsyncpa [#allocation4], 0
    %s22 = scalar_lea.sflag [#allocation4], 1
    %23 = vsyncpa %s22, 0
    loop: start=0, step=1, limit=4
    $region2: #{tpu_custom_call.1} parent=1 // loop_pre_header
      _
    $region3: #{tpu_custom_call.1} parent=1 // loop_header
      %s25 = sphi 0, %s29
      %p26 = scmp.ge.s32.totalorder %s25, 4
      %s35 = sphi 0, %s37
      %s38 = sphi 0, %s35
      %s39 = sphi 0, %s38
      %s55 = sphi 0, %s39
      %s61 = sphi 0, %s63
      %s64 = sphi 0, %s61
      %s65 = sphi 0, %s64
      %s81 = sphi 0, %s65
      %s85 = sphi 0, %s85
      %s87 = sphi 0, %s85
      %s88 = sphi 0, %s87
      %s102 = sphi 0, %s88
      %s106 = sphi 0, %s106
      %s108 = sphi 0, %s106
      %s109 = sphi 0, %s108
      %s123 = sphi 0, %s109
      %s127 = sphi 0, %s127
      %s129 = sphi 0, %s127
      %s130 = sphi 0, %s129
      %s144 = sphi 0, %s130
      %s148 = sphi 0, %s148
      %s150 = sphi 0, %s148
      %s151 = sphi 0, %s150
      %s165 = sphi 0, %s151
      %s169 = sphi 0, %s169
      %s171 = sphi 0, %s169
      %s172 = sphi 0, %s171
      %s186 = sphi 0, %s172
      %s192 = sphi 0, %s194
      %s195 = sphi 0, %s192
      %s196 = sphi 0, %s195
      %s212 = sphi 0, %s196
      %s218 = sphi 0, %s220
      %s221 = sphi 0, %s218
      %s222 = sphi 0, %s221
      %s238 = sphi 0, %s222
    $region4: #{tpu_custom_call.1} parent=1 // loop_header_branch
      %28 = sbr.rel (%p26) target = $region8
    $region5: #{tpu_custom_call.1} parent=1 // loop_body
      %s30 = ssub.s32 %s25, 1
      %s31 = ssub.s32 %s25, 2
      %s32 = sadd.s32 %s25, 1
      %s33 = ssub.s32 %s25, %s32
      %p34 = scmp.eq.s32.totalorder %s33, 0
      %s36 = sadd.s32 %s35, 1
      %s37 = scalar_select %p34, %s35, %s36
      %p40 = pneg %p34
      %p41 = scmp.eq.s32.totalorder %s25, 1
      %p42 = por %p40, %p41
      %p43 = scmp.ne.s32.totalorder %s35, %s38
      %p44 = scmp.eq.s32.totalorder %s25, 0
      %p45 = por %p43, %p44
      %p46 = scmp.ne.s32.totalorder %s35, %s38
      %p47 = scmp.eq.s32.totalorder %s30, 1
      %p48 = por %p46, %p47
      %p49 = scmp.ne.s32.totalorder %s38, %s39
      %p50 = scmp.eq.s32.totalorder %s30, 0
      %p51 = por %p49, %p50
      %p52 = scmp.ne.s32.totalorder %s38, %s39
      %p53 = scmp.eq.s32.totalorder %s31, 1
      %p54 = por %p52, %p53
      %p56 = scmp.ne.s32.totalorder %s39, %s55
      %p57 = scmp.eq.s32.totalorder %s31, 0
      %p58 = por %p56, %p57
      %s59 = ssub.s32 %s25, %s32
      %p60 = scmp.eq.s32.totalorder %s59, 0
      %s62 = sadd.s32 %s61, 1
      %s63 = scalar_select %p60, %s61, %s62
      %p66 = pneg %p60
      %p67 = scmp.eq.s32.totalorder %s25, 1
      %p68 = por %p66, %p67
      %p69 = scmp.ne.s32.totalorder %s61, %s64
      %p70 = scmp.eq.s32.totalorder %s25, 0
      %p71 = por %p69, %p70
      %p72 = scmp.ne.s32.totalorder %s61, %s64
      %p73 = scmp.eq.s32.totalorder %s30, 1
      %p74 = por %p72, %p73
      %p75 = scmp.ne.s32.totalorder %s64, %s65
      %p76 = scmp.eq.s32.totalorder %s30, 0
      %p77 = por %p75, %p76
      %p78 = scmp.ne.s32.totalorder %s64, %s65
      %p79 = scmp.eq.s32.totalorder %s31, 1
      %p80 = por %p78, %p79
      %p82 = scmp.ne.s32.totalorder %s65, %s81
      %p83 = scmp.eq.s32.totalorder %s31, 0
      %p84 = por %p82, %p83
      %s86 = sadd.s32 %s85, 1
      %p89 = scmp.eq.s32.totalorder %s25, 1
      %p90 = scmp.ne.s32.totalorder %s85, %s87
      %p91 = scmp.eq.s32.totalorder %s25, 0
      %p92 = por %p90, %p91
      %p93 = scmp.ne.s32.totalorder %s85, %s87
      %p94 = scmp.eq.s32.totalorder %s30, 1
      %p95 = por %p93, %p94
      %p96 = scmp.ne.s32.totalorder %s87, %s88
      %p97 = scmp.eq.s32.totalorder %s30, 0
      %p98 = por %p96, %p97
      %p99 = scmp.ne.s32.totalorder %s87, %s88
      %p100 = scmp.eq.s32.totalorder %s31, 1
      %p101 = por %p99, %p100
      %p103 = scmp.ne.s32.totalorder %s88, %s102
      %p104 = scmp.eq.s32.totalorder %s31, 0
      %p105 = por %p103, %p104
      %s107 = sadd.s32 %s106, 1
      %p110 = scmp.eq.s32.totalorder %s25, 1
      %p111 = scmp.ne.s32.totalorder %s106, %s108
      %p112 = scmp.eq.s32.totalorder %s25, 0
      %p113 = por %p111, %p112
      %p114 = scmp.ne.s32.totalorder %s106, %s108
      %p115 = scmp.eq.s32.totalorder %s30, 1
      %p116 = por %p114, %p115
      %p117 = scmp.ne.s32.totalorder %s108, %s109
      %p118 = scmp.eq.s32.totalorder %s30, 0
      %p119 = por %p117, %p118
      %p120 = scmp.ne.s32.totalorder %s108, %s109
      %p121 = scmp.eq.s32.totalorder %s31, 1
      %p122 = por %p120, %p121
      %p124 = scmp.ne.s32.totalorder %s109, %s123
      %p125 = scmp.eq.s32.totalorder %s31, 0
      %p126 = por %p124, %p125
      %s128 = sadd.s32 %s127, 1
      %p131 = scmp.eq.s32.totalorder %s25, 1
      %p132 = scmp.ne.s32.totalorder %s127, %s129
      %p133 = scmp.eq.s32.totalorder %s25, 0
      %p134 = por %p132, %p133
      %p135 = scmp.ne.s32.totalorder %s127, %s129
      %p136 = scmp.eq.s32.totalorder %s30, 1
      %p137 = por %p135, %p136
      %p138 = scmp.ne.s32.totalorder %s129, %s130
      %p139 = scmp.eq.s32.totalorder %s30, 0
      %p140 = por %p138, %p139
      %p141 = scmp.ne.s32.totalorder %s129, %s130
      %p142 = scmp.eq.s32.totalorder %s31, 1
      %p143 = por %p141, %p142
      %p145 = scmp.ne.s32.totalorder %s130, %s144
      %p146 = scmp.eq.s32.totalorder %s31, 0
      %p147 = por %p145, %p146
      %s149 = sadd.s32 %s148, 1
      %p152 = scmp.eq.s32.totalorder %s25, 1
      %p153 = scmp.ne.s32.totalorder %s148, %s150
      %p154 = scmp.eq.s32.totalorder %s25, 0
      %p155 = por %p153, %p154
      %p156 = scmp.ne.s32.totalorder %s148, %s150
      %p157 = scmp.eq.s32.totalorder %s30, 1
      %p158 = por %p156, %p157
      %p159 = scmp.ne.s32.totalorder %s150, %s151
      %p160 = scmp.eq.s32.totalorder %s30, 0
      %p161 = por %p159, %p160
      %p162 = scmp.ne.s32.totalorder %s150, %s151
      %p163 = scmp.eq.s32.totalorder %s31, 1
      %p164 = por %p162, %p163
      %p166 = scmp.ne.s32.totalorder %s151, %s165
      %p167 = scmp.eq.s32.totalorder %s31, 0
      %p168 = por %p166, %p167
      %s170 = sadd.s32 %s169, 1
      %p173 = scmp.eq.s32.totalorder %s25, 1
      %p174 = scmp.ne.s32.totalorder %s169, %s171
      %p175 = scmp.eq.s32.totalorder %s25, 0
      %p176 = por %p174, %p175
      %p177 = scmp.ne.s32.totalorder %s169, %s171
      %p178 = scmp.eq.s32.totalorder %s30, 1
      %p179 = por %p177, %p178
      %p180 = scmp.ne.s32.totalorder %s171, %s172
      %p181 = scmp.eq.s32.totalorder %s30, 0
      %p182 = por %p180, %p181
      %p183 = scmp.ne.s32.totalorder %s171, %s172
      %p184 = scmp.eq.s32.totalorder %s31, 1
      %p185 = por %p183, %p184
      %p187 = scmp.ne.s32.totalorder %s172, %s186
      %p188 = scmp.eq.s32.totalorder %s31, 0
      %p189 = por %p187, %p188
      %s190 = ssub.s32 %s25, %s32
      %p191 = scmp.eq.s32.totalorder %s190, 0
      %s193 = sadd.s32 %s192, 1
      %s194 = scalar_select %p191, %s192, %s193
      %p197 = pneg %p191
      %p198 = scmp.eq.s32.totalorder %s25, 1
      %p199 = por %p197, %p198
      %p200 = scmp.ne.s32.totalorder %s192, %s195
      %p201 = scmp.eq.s32.totalorder %s25, 0
      %p202 = por %p200, %p201
      %p203 = scmp.ne.s32.totalorder %s192, %s195
      %p204 = scmp.eq.s32.totalorder %s30, 1
      %p205 = por %p203, %p204
      %p206 = scmp.ne.s32.totalorder %s195, %s196
      %p207 = scmp.eq.s32.totalorder %s30, 0
      %p208 = por %p206, %p207
      %p209 = scmp.ne.s32.totalorder %s195, %s196
      %p210 = scmp.eq.s32.totalorder %s31, 1
      %p211 = por %p209, %p210
      %p213 = scmp.ne.s32.totalorder %s196, %s212
      %p214 = scmp.eq.s32.totalorder %s31, 0
      %p215 = por %p213, %p214
      %s216 = ssub.s32 %s25, %s32
      %p217 = scmp.eq.s32.totalorder %s216, 0
      %s219 = sadd.s32 %s218, 1
      %s220 = scalar_select %p217, %s218, %s219
      %p223 = pneg %p217
      %p224 = scmp.eq.s32.totalorder %s25, 1
      %p225 = por %p223, %p224
      %p226 = scmp.ne.s32.totalorder %s218, %s221
      %p227 = scmp.eq.s32.totalorder %s25, 0
      %p228 = por %p226, %p227
      %p229 = scmp.ne.s32.totalorder %s218, %s221
      %p230 = scmp.eq.s32.totalorder %s30, 1
      %p231 = por %p229, %p230
      %p232 = scmp.ne.s32.totalorder %s221, %s222
      %p233 = scmp.eq.s32.totalorder %s30, 0
      %p234 = por %p232, %p233
      %p235 = scmp.ne.s32.totalorder %s221, %s222
      %p236 = scmp.eq.s32.totalorder %s31, 1
      %p237 = por %p235, %p236
      %p239 = scmp.ne.s32.totalorder %s222, %s238
      %p240 = scmp.eq.s32.totalorder %s31, 0
      %p241 = por %p239, %p240
      %p242 = scmp.le.s32.totalorder 1, %s25
      %p243 = scmp.lt.s32.totalorder %s25, 3
      %p244 = pnand %p242, %p243
      %p245 = pneg %p244
      // Predicated region
      $region9: #{tpu_custom_call.1} parent=5 // pred_check
        _
      $region10: #{tpu_custom_call.1} parent=5 // pred_check_branch
        %247 = sbr.rel (%p244) target = $region12
      $region11: #{tpu_custom_call.1} parent=5 // pred_region
        %s248 = ssub.s32 %s25, 1
        // Predicated region
        $region13: #{tpu_custom_call.1} parent=11 // pred_check
          %p249 = pneg %p98
        $region14: #{tpu_custom_call.1} parent=11 // pred_check_branch
          %251 = sbr.rel (%p249) target = $region16
        $region15: #{tpu_custom_call.1} parent=11 // pred_region
          %253 = vsyncadd [#allocation6], 0
          %s254 = sshll.u32 %s2, 4
          %s255 = int_to_ptr.hbm [resolvable:$true] %s254
          %s256 = sshll.u32 [#allocation7], 4
          %s257 = int_to_ptr.vmem [resolvable:$true] %s256
          %262 = dma.hbm_to_vmem [thread:$0]  %s255, 512, %s257, [#allocation6], 128, 128, 8
        $region16: #{tpu_custom_call.1} parent=11 // pred_fallthru
          _
        // Predicated region
        $region17: #{tpu_custom_call.1} parent=11 // pred_check
          %p263 = pneg %p119
        $region18: #{tpu_custom_call.1} parent=11 // pred_check_branch
          %265 = sbr.rel (%p263) target = $region20
        $region19: #{tpu_custom_call.1} parent=11 // pred_region
          %267 = vsyncadd [#allocation9], 0
          %s268 = sshll.u32 %s3, 4
          %s269 = int_to_ptr.hbm [resolvable:$true] %s268
          %s270 = sshll.u32 [#allocation8], 4
          %s271 = int_to_ptr.vmem [resolvable:$true] %s270
          %276 = dma.hbm_to_vmem [thread:$0]  %s269, 256, %s271, [#allocation9], 128, 128, 8
        $region20: #{tpu_custom_call.1} parent=11 // pred_fallthru
          _
        // Predicated region
        $region21: #{tpu_custom_call.1} parent=11 // pred_check
          %p277 = pneg %p140
        $region22: #{tpu_custom_call.1} parent=11 // pred_check_branch
          %279 = sbr.rel (%p277) target = $region24
        $region23: #{tpu_custom_call.1} parent=11 // pred_region
          _
        $region24: #{tpu_custom_call.1} parent=11 // pred_fallthru
          _
        // Predicated region
        $region25: #{tpu_custom_call.1} parent=11 // pred_check
          %p280 = pneg %p161
        $region26: #{tpu_custom_call.1} parent=11 // pred_check_branch
          %282 = sbr.rel (%p280) target = $region28
        $region27: #{tpu_custom_call.1} parent=11 // pred_region
          _
        $region28: #{tpu_custom_call.1} parent=11 // pred_fallthru
          _
        // Predicated region
        $region29: #{tpu_custom_call.1} parent=11 // pred_check
          %p283 = pneg %p182
        $region30: #{tpu_custom_call.1} parent=11 // pred_check_branch
          %285 = sbr.rel (%p283) target = $region32
        $region31: #{tpu_custom_call.1} parent=11 // pred_region
          _
        $region32: #{tpu_custom_call.1} parent=11 // pred_fallthru
          _
      $region12: #{tpu_custom_call.1} parent=5 // pred_fallthru
        _
      %p286 = scmp.lt.s32.totalorder %s25, 2
      // Predicated region
      $region33: #{tpu_custom_call.1} parent=5 // pred_check
        %p287 = pneg %p286
      $region34: #{tpu_custom_call.1} parent=5 // pred_check_branch
        %289 = sbr.rel (%p287) target = $region36
      $region35: #{tpu_custom_call.1} parent=5 // pred_region
        // Predicated region
        $region37: #{tpu_custom_call.1} parent=35 // pred_check
          %p290 = pneg %p45
        $region38: #{tpu_custom_call.1} parent=35 // pred_check_branch
          %292 = sbr.rel (%p290) target = $region40
        $region39: #{tpu_custom_call.1} parent=35 // pred_region
          %s293 = sand.u32 %s35, 1
          %s294 = scalar_lea.sflag [#allocation3], %s293
          %s295 = sand.u32 %s35, 1
          %s296 = smul.addr %s295, 64
          %s297 = scalar_lea.vmem [#allocation2], %s296
          %s298 = smul.u32 8, %s25
          %300 = vsyncadd %s294, 0
          %s301 = smul.addr %s298, 8
          %s302 = scalar_lea.hbm %s0, %s301
          %s303 = sshll.u32 %s302, 4
          %s304 = int_to_ptr.hbm [resolvable:$true] %s303
          %s305 = sshll.u32 %s297, 4
          %s306 = int_to_ptr.vmem [resolvable:$true] %s305
          %311 = dma.hbm_to_vmem [thread:$0]  %s304, 1024, %s306, %s294, 128, 128, 8
        $region40: #{tpu_custom_call.1} parent=35 // pred_fallthru
          _
        // Predicated region
        $region41: #{tpu_custom_call.1} parent=35 // pred_check
          %p312 = pneg %p71
        $region42: #{tpu_custom_call.1} parent=35 // pred_check_branch
          %314 = sbr.rel (%p312) target = $region44
        $region43: #{tpu_custom_call.1} parent=35 // pred_region
          %s315 = sand.u32 %s25, 1
          %s316 = scalar_lea.sflag [#allocation6], %s315
          %s317 = sand.u32 %s61, 1
          %s318 = smul.addr %s317, 8
          %s319 = scalar_lea.vmem [#allocation5], %s318
          %321 = vsyncadd %s316, 0
          %s322 = smul.addr %s25, 8
          %s323 = scalar_lea.hbm %s1, %s322
          %s325 = sshll.u32 %s323, 4
          %s326 = int_to_ptr.hbm [resolvable:$true] %s325
          %s327 = sshll.u32 %s319, 4
          %s328 = int_to_ptr.vmem [resolvable:$true] %s327
          %330 = dma.hbm_to_vmem [thread:$0]  %s326, 128, %s328, %s316
        $region44: #{tpu_custom_call.1} parent=35 // pred_fallthru
          _
      $region36: #{tpu_custom_call.1} parent=5 // pred_fallthru
        _
      %p331 = scmp.le.s32.totalorder 1, %s25
      %p332 = scmp.lt.s32.totalorder %s25, 3
      %p333 = pnand %p331, %p332
      %p334 = pneg %p333
      // Predicated region
      $region45: #{tpu_custom_call.1} parent=5 // pred_check
        _
      $region46: #{tpu_custom_call.1} parent=5 // pred_check_branch
        %336 = sbr.rel (%p333) target = $region48
      $region47: #{tpu_custom_call.1} parent=5 // pred_region
        %s337 = ssub.s32 %s25, 1
        %s338 = sand.u32 %s38, 1
        %s339 = scalar_lea.sflag [#allocation3], %s338
        %s340 = sand.u32 %s38, 1
        %s341 = smul.addr %s340, 64
        %s342 = scalar_lea.vmem [#allocation2], %s341
        // Predicated region
        $region49: #{tpu_custom_call.1} parent=47 // pred_check
          %p343 = pneg %p51
        $region50: #{tpu_custom_call.1} parent=47 // pred_check_branch
          %345 = sbr.rel (%p343) target = $region52
        $region51: #{tpu_custom_call.1} parent=47 // pred_region
          %347 = dma.done %s339, 1024
        $region52: #{tpu_custom_call.1} parent=47 // pred_fallthru
          _
        %s348 = sand.u32 %s30, 1
        %s349 = scalar_lea.sflag [#allocation6], %s348
        %s350 = sand.u32 %s64, 1
        %s351 = smul.addr %s350, 8
        %s352 = scalar_lea.vmem [#allocation5], %s351
        // Predicated region
        $region53: #{tpu_custom_call.1} parent=47 // pred_check
          %p353 = pneg %p77
        $region54: #{tpu_custom_call.1} parent=47 // pred_check_branch
          %355 = sbr.rel (%p353) target = $region56
        $region55: #{tpu_custom_call.1} parent=47 // pred_region
          %357 = dma.done %s349, 128
        $region56: #{tpu_custom_call.1} parent=47 // pred_fallthru
          _
        // Predicated region
        $region57: #{tpu_custom_call.1} parent=47 // pred_check
          %p358 = pneg %p98
        $region58: #{tpu_custom_call.1} parent=47 // pred_check_branch
          %360 = sbr.rel (%p358) target = $region60
        $region59: #{tpu_custom_call.1} parent=47 // pred_region
          %362 = dma.done [#allocation6], 512
        $region60: #{tpu_custom_call.1} parent=47 // pred_fallthru
          _
        // Predicated region
        $region61: #{tpu_custom_call.1} parent=47 // pred_check
          %p363 = pneg %p119
        $region62: #{tpu_custom_call.1} parent=47 // pred_check_branch
          %365 = sbr.rel (%p363) target = $region64
        $region63: #{tpu_custom_call.1} parent=47 // pred_region
          %367 = dma.done [#allocation9], 256
        $region64: #{tpu_custom_call.1} parent=47 // pred_fallthru
          _
        %s368 = sand.u32 %s38, 1
        %s369 = scalar_lea.sflag [#allocation3], %s368
        %s370 = sand.u32 %s38, 1
        %s371 = smul.addr %s370, 64
        %s372 = scalar_lea.vmem [#allocation2], %s371
        %p373 = pneg %p51
        %p374 = pneg %p48
        %s375 = sand.u32 %s30, 1
        %s376 = scalar_lea.sflag [#allocation6], %s375
        %s377 = sand.u32 %s64, 1
        %s378 = smul.addr %s377, 8
        %s379 = scalar_lea.vmem [#allocation5], %s378
        %p380 = pneg %p77
        %p381 = pneg %p74
        %p382 = pneg %p98
        %p383 = pneg %p95
        %p384 = pneg %p119
        %p385 = pneg %p116
        %p386 = pneg %p140
        %p387 = pneg %p137
        %p388 = pneg %p161
        %p389 = pneg %p158
        %p390 = pneg %p182
        %p391 = pneg %p179
        %p392 = pneg %p208
        %p393 = pneg %p205
        %s394 = sand.u32 %s195, 1
        %s395 = scalar_lea.sflag [#allocation4], %s394
        %s396 = sand.u32 %s195, 1
        %s397 = smul.addr %s396, 8
        %s398 = scalar_lea.vmem [#allocation10], %s397
        %p399 = pneg %p234
        %p400 = pneg %p231
        %p401 = scmp.lt.s32.totalorder %s30, 1
        %s402 = scalar_select %p401, %s30, 1
        %s403 = smul.addr %s402, 8
        %s404 = scalar_lea.vmem %s8, %s403
        %s405 = smul.u32 8, %s30
        %p406 = scmp.lt.s32.totalorder %s30, 1
        %s407 = scalar_select %p406, %s30, 1
        %s408 = smul.addr %s407, 8
        %s409 = scalar_lea.vmem %s8, %s408
        %v410 = vld [vmem:[%s342] sm:$0xff]
        %v411 = vld [vmem:[%s342 + $0x8] sm:$0xff]
        %v412 = vld [vmem:[%s342 + $0x10] sm:$0xff]
        %v413 = vld [vmem:[%s342 + $0x18] sm:$0xff]
        %v414 = vld [vmem:[%s342 + $0x20] sm:$0xff]
        %v415 = vld [vmem:[%s342 + $0x28] sm:$0xff]
        %v416 = vld [vmem:[%s342 + $0x30] sm:$0xff]
        %v417 = vld [vmem:[%s342 + $0x38] sm:$0xff]
        %v418 = vld [vmem:[#allocation7] sm:$0xff]
        %v419 = vld [vmem:[#allocation7 + $0x8] sm:$0xff]
        %v420 = vld [vmem:[#allocation7 + $0x10] sm:$0xff]
        %v421 = vld [vmem:[#allocation7 + $0x18] sm:$0xff]
        %vm422 = vcmask 261120
        %v424 = vsel %vm422, %v410, 0
        %v427 = vsel %vm422, %v411, 0
        %v430 = vsel %vm422, %v412, 0
        %v433 = vsel %vm422, %v413, 0
        %v436 = vsel %vm422, %v414, 0
        %v439 = vsel %vm422, %v415, 0
        %v442 = vsel %vm422, %v416, 0
        %v445 = vsel %vm422, %v417, 0
        %447 = vmatpush.msra.mxu0 0.0
        %448 = vmatpush.msra.mxu0 0.0
        %449 = vmatpush.msra.mxu0 0.0
        %450 = vmatpush.msra.mxu0 0.0
        %451 = vmatpush.msra.mxu0 0.0
        %452 = vmatpush.msra.mxu0 0.0
        %453 = vmatpush.msra.mxu0 0.0
        %454 = vmatpush.msra.mxu0 0.0
        %455 = vmatpush.msra.mxu0 0.0
        %456 = vmatpush.msra.mxu0 0.0
        %457 = vmatpush.msra.mxu0 0.0
        %458 = vmatpush.msra.mxu0 0.0
        %459 = vmatpush.msra.mxu0 %v421
        %460 = vmatpush.msra.mxu0 %v420
        %461 = vmatpush.msra.mxu0 %v419
        %462 = vmatpush.msra.mxu0 %v418
        %463 = vmatmul.f32.gmra.mxu0 %v424
        %v464 = vpop.f32.mrf.mxu0
        %v465 = vadd.f32 0.0, %v464
        %466 = vmatmul.f32.gmra.mxu0 %v427
        %v467 = vpop.f32.mrf.mxu0
        %v468 = vadd.f32 0.0, %v467
        %469 = vmatmul.f32.gmra.mxu0 %v430
        %v470 = vpop.f32.mrf.mxu0
        %v471 = vadd.f32 0.0, %v470
        %472 = vmatmul.f32.gmra.mxu0 %v433
        %v473 = vpop.f32.mrf.mxu0
        %v474 = vadd.f32 0.0, %v473
        %475 = vmatmul.f32.gmra.mxu0 %v436
        %v476 = vpop.f32.mrf.mxu0
        %v477 = vadd.f32 0.0, %v476
        %478 = vmatmul.f32.gmra.mxu0 %v439
        %v479 = vpop.f32.mrf.mxu0
        %v480 = vadd.f32 0.0, %v479
        %481 = vmatmul.f32.gmra.mxu0 %v442
        %v482 = vpop.f32.mrf.mxu0
        %v483 = vadd.f32 0.0, %v482
        %484 = vmatmul.f32.gmra.mxu0 %v445
        %v485 = vpop.f32.mrf.mxu0
        %v486 = vadd.f32 0.0, %v485
        %487 = vdwg.mxu0
        %v488 = vld [vmem:[%s352] sm:$0xff]
        %v489 = vld [vmem:[#allocation8] sm:$0xff]
        %v490 = vld [vmem:[#allocation8 + $0x8] sm:$0xff]
        %v491 = vld [vmem:[%s4] sm:$0x1]
        %v493 = vperm.slane %v491, 0
        %vm495 = vcmask 130048
        %v497 = vsel %vm495, %v488, 0
        %499 = vmatpush.msra.mxu0 0.0
        %500 = vmatpush.msra.mxu0 0.0
        %501 = vmatpush.msra.mxu0 0.0
        %502 = vmatpush.msra.mxu0 0.0
        %503 = vmatpush.msra.mxu0 0.0
        %504 = vmatpush.msra.mxu0 0.0
        %505 = vmatpush.msra.mxu0 0.0
        %506 = vmatpush.msra.mxu0 0.0
        %507 = vmatpush.msra.mxu0 0.0
        %508 = vmatpush.msra.mxu0 0.0
        %509 = vmatpush.msra.mxu0 0.0
        %510 = vmatpush.msra.mxu0 0.0
        %511 = vmatpush.msra.mxu0 0.0
        %512 = vmatpush.msra.mxu0 0.0
        %513 = vmatpush.msra.mxu0 %v490
        %514 = vmatpush.msra.mxu0 %v489
        %515 = vmatmul.f32.gmra.mxu0 %v497
        %v516 = vpop.f32.mrf.mxu0
        %v517 = vadd.f32 %v493, %v516
        %518 = vdwg.mxu0
        %v520 = vrot.slane %v517, 1
        %v521 = vrot.slane %v517, 2
        %v522 = vrot.slane %v517, 3
        %v523 = vrot.slane %v517, 4
        %v524 = vrot.slane %v517, 5
        %v525 = vrot.slane %v517, 6
        %v526 = vrot.slane %v517, 7
        %v527 = vperm.slane %v517, 0
        %v528 = vperm.slane %v520, 0
        %v529 = vperm.slane %v521, 0
        %v530 = vperm.slane %v522, 0
        %v531 = vperm.slane %v523, 0
        %v532 = vperm.slane %v524, 0
        %v533 = vperm.slane %v525, 0
        %v534 = vperm.slane %v526, 0
        %v543 = vadd.f32 %v465, %v527
        %v544 = vadd.f32 %v468, %v528
        %v545 = vadd.f32 %v471, %v529
        %v546 = vadd.f32 %v474, %v530
        %v547 = vadd.f32 %v477, %v531
        %v548 = vadd.f32 %v480, %v532
        %v549 = vadd.f32 %v483, %v533
        %v550 = vadd.f32 %v486, %v534
        %v551 = vmax.f32 %v543, 0.0
        %v552 = vmax.f32 %v544, 0.0
        %v553 = vmax.f32 %v545, 0.0
        %v554 = vmax.f32 %v546, 0.0
        %v555 = vmax.f32 %v547, 0.0
        %v556 = vmax.f32 %v548, 0.0
        %v557 = vmax.f32 %v549, 0.0
        %v558 = vmax.f32 %v550, 0.0
        %v559 = vld [vmem:[%s5] sm:$0x1]
        %v561 = vperm.slane %v559, 0
        %v563 = vmul.f32 %v551, %v561
        %v564 = vmul.f32 %v552, %v561
        %v565 = vmul.f32 %v553, %v561
        %v566 = vmul.f32 %v554, %v561
        %v567 = vmul.f32 %v555, %v561
        %v568 = vmul.f32 %v556, %v561
        %v569 = vmul.f32 %v557, %v561
        %v570 = vmul.f32 %v558, %v561
        %v571 = vsel %vm422, %v563, 0.0
        %572 = vadd.xlane.f32.xlu0 %v571
        %v573 = vpop.xlane.xlu0 %572
        %v574 = vsel %vm422, %v564, 0.0
        %575 = vadd.xlane.f32.xlu0 %v574
        %v576 = vpop.xlane.xlu0 %575
        %v577 = vsel %vm422, %v565, 0.0
        %578 = vadd.xlane.f32.xlu0 %v577
        %v579 = vpop.xlane.xlu0 %578
        %v580 = vsel %vm422, %v566, 0.0
        %581 = vadd.xlane.f32.xlu0 %v580
        %v582 = vpop.xlane.xlu0 %581
        %v583 = vsel %vm422, %v567, 0.0
        %584 = vadd.xlane.f32.xlu0 %v583
        %v585 = vpop.xlane.xlu0 %584
        %v586 = vsel %vm422, %v568, 0.0
        %587 = vadd.xlane.f32.xlu0 %v586
        %v588 = vpop.xlane.xlu0 %587
        %v589 = vsel %vm422, %v569, 0.0
        %590 = vadd.xlane.f32.xlu0 %v589
        %v591 = vpop.xlane.xlu0 %590
        %v592 = vsel %vm422, %v570, 0.0
        %593 = vadd.xlane.f32.xlu0 %v592
        %v594 = vpop.xlane.xlu0 %593
        %v595 = vld [vmem:[%s6] sm:$0x1]
        %v597 = vperm.slane %v595, 0
        %v598 = vlaneseq
        %v599 = vshrl.u32 %v598, 7
        %601 = vset.pattern.permute.xlu0 %v599
        %602 = vperm.xlu0 %601, %v597
        %v603 = vpop.permute.xlu0 %602
        %v605 = vadd.f32 %v573, %v603
        %v606 = vadd.f32 %v576, %v603
        %v607 = vadd.f32 %v579, %v603
        %v608 = vadd.f32 %v582, %v603
        %v609 = vadd.f32 %v585, %v603
        %v610 = vadd.f32 %v588, %v603
        %v611 = vadd.f32 %v591, %v603
        %v612 = vadd.f32 %v594, %v603
        %621 = vset.pattern.permute.xlu0 0
        %622 = vperm.xlu0 %621, %v605
        %v623 = vpop.permute.xlu0 %622
        %624 = vset.pattern.permute.xlu0 0
        %625 = vperm.xlu0 %624, %v606
        %v626 = vpop.permute.xlu0 %625
        %627 = vset.pattern.permute.xlu0 0
        %628 = vperm.xlu0 %627, %v607
        %v629 = vpop.permute.xlu0 %628
        %630 = vset.pattern.permute.xlu0 0
        %631 = vperm.xlu0 %630, %v608
        %v632 = vpop.permute.xlu0 %631
        %633 = vset.pattern.permute.xlu0 0
        %634 = vperm.xlu0 %633, %v609
        %v635 = vpop.permute.xlu0 %634
        %636 = vset.pattern.permute.xlu0 0
        %637 = vperm.xlu0 %636, %v610
        %v638 = vpop.permute.xlu0 %637
        %639 = vset.pattern.permute.xlu0 0
        %640 = vperm.xlu0 %639, %v611
        %v641 = vpop.permute.xlu0 %640
        %642 = vset.pattern.permute.xlu0 0
        %643 = vperm.xlu0 %642, %v612
        %v644 = vpop.permute.xlu0 %643
        %v645 = vlaneseq
        %v646 = vand.u32 %v645, 127
        %v647 = vperm.slane %v623, %v646
        %v648 = vperm.slane %v626, %v646
        %v649 = vperm.slane %v629, %v646
        %v650 = vperm.slane %v632, %v646
        %v651 = vperm.slane %v635, %v646
        %v652 = vperm.slane %v638, %v646
        %v653 = vperm.slane %v641, %v646
        %v654 = vperm.slane %v644, %v646
        %vm655 = vcmask 1041409
        %v656 = vsel %vm655, %v648, %v647
        %vm657 = vcmask 1042434
        %v658 = vsel %vm657, %v649, %v656
        %vm659 = vcmask 1043459
        %v660 = vsel %vm659, %v650, %v658
        %vm661 = vcmask 1044484
        %v662 = vsel %vm661, %v651, %v660
        %vm663 = vcmask 1045509
        %v664 = vsel %vm663, %v652, %v662
        %vm665 = vcmask 1046534
        %v666 = vsel %vm665, %v653, %v664
        %vm667 = vcmask 1047559
        %v668 = vsel %vm667, %v654, %v666
        %vm670 = vcmask 64512
        %v671 = vsel %vm670, %v668, -inf
        %672 = vmax.xlane.f32.xlu0 %v671
        %v673 = vpop.xlane.xlu0 %672
        %v675 = vperm.slane %v673, 0
        %v676 = vperm.slane %v673, 1
        %v677 = vperm.slane %v673, 2
        %v678 = vperm.slane %v673, 3
        %v679 = vperm.slane %v673, 4
        %v680 = vperm.slane %v673, 5
        %v681 = vperm.slane %v673, 6
        %v682 = vperm.slane %v673, 7
        %v691 = vsub.f32 %v605, %v675
        %v692 = vsub.f32 %v606, %v676
        %v693 = vsub.f32 %v607, %v677
        %v694 = vsub.f32 %v608, %v678
        %v695 = vsub.f32 %v609, %v679
        %v696 = vsub.f32 %v610, %v680
        %v697 = vsub.f32 %v611, %v681
        %v698 = vsub.f32 %v612, %v682
        %v699 = vmul.f32 %v691, 1.442695
        %v700 = vpow.pop %v699
        %v701 = vmul.f32 %v692, 1.442695
        %v702 = vpow.pop %v701
        %v703 = vmul.f32 %v693, 1.442695
        %v704 = vpow.pop %v703
        %v705 = vmul.f32 %v694, 1.442695
        %v706 = vpow.pop %v705
        %v707 = vmul.f32 %v695, 1.442695
        %v708 = vpow.pop %v707
        %v709 = vmul.f32 %v696, 1.442695
        %v710 = vpow.pop %v709
        %v711 = vmul.f32 %v697, 1.442695
        %v712 = vpow.pop %v711
        %v713 = vmul.f32 %v698, 1.442695
        %v714 = vpow.pop %v713
        %723 = vset.pattern.permute.xlu0 0
        %724 = vperm.xlu0 %723, %v700
        %v725 = vpop.permute.xlu0 %724
        %726 = vset.pattern.permute.xlu0 0
        %727 = vperm.xlu0 %726, %v702
        %v728 = vpop.permute.xlu0 %727
        %729 = vset.pattern.permute.xlu0 0
        %730 = vperm.xlu0 %729, %v704
        %v731 = vpop.permute.xlu0 %730
        %732 = vset.pattern.permute.xlu0 0
        %733 = vperm.xlu0 %732, %v706
        %v734 = vpop.permute.xlu0 %733
        %735 = vset.pattern.permute.xlu0 0
        %736 = vperm.xlu0 %735, %v708
        %v737 = vpop.permute.xlu0 %736
        %738 = vset.pattern.permute.xlu0 0
        %739 = vperm.xlu0 %738, %v710
        %v740 = vpop.permute.xlu0 %739
        %741 = vset.pattern.permute.xlu0 0
        %742 = vperm.xlu0 %741, %v712
        %v743 = vpop.permute.xlu0 %742
        %744 = vset.pattern.permute.xlu0 0
        %745 = vperm.xlu0 %744, %v714
        %v746 = vpop.permute.xlu0 %745
        %v747 = vperm.slane %v725, %v646
        %v748 = vperm.slane %v728, %v646
        %v749 = vperm.slane %v731, %v646
        %v750 = vperm.slane %v734, %v646
        %v751 = vperm.slane %v737, %v646
        %v752 = vperm.slane %v740, %v646
        %v753 = vperm.slane %v743, %v646
        %v754 = vperm.slane %v746, %v646
        %v755 = vsel %vm655, %v748, %v747
        %v756 = vsel %vm657, %v749, %v755
        %v757 = vsel %vm659, %v750, %v756
        %v758 = vsel %vm661, %v751, %v757
        %v759 = vsel %vm663, %v752, %v758
        %v760 = vsel %vm665, %v753, %v759
        %v761 = vsel %vm667, %v754, %v760
        %v763 = vsel %vm670, %v761, 0.0
        %764 = vadd.xlane.f32.xlu0 %v763
        %v765 = vpop.xlane.xlu0 %764
        %v767 = vperm.slane %v765, 0
        %v768 = vperm.slane %v765, 1
        %v769 = vperm.slane %v765, 2
        %v770 = vperm.slane %v765, 3
        %v771 = vperm.slane %v765, 4
        %v772 = vperm.slane %v765, 5
        %v773 = vperm.slane %v765, 6
        %v774 = vperm.slane %v765, 7
        %v783 = vrcp.pop %v767
        %v784 = vmul.f32 %v767, %v783
        %v785 = vsub.f32 1.0, %v784
        %v786 = vmul.f32 %v783, %v785
        %v787 = vadd.f32 %v783, %v786
        %vm788 = vweird.f32 %v767
        %vm789 = vweird.f32 %v783
        %vm790 = vmor %vm788, %vm789
        %v791 = vsel %vm790, %v783, %v787
        %v792 = vand.u32 2147483647, %v767
        %vm793 = vcmp.eq.f32.partialorder %v792, 8.507059e+37
        %v794 = vand.u32 %v767, 2147483648
        %v795 = vor.u32 1.1754944e-38, %v794
        %v796 = vsel %vm793, %v795, %v791
        %v797 = vmul.f32 %v700, %v796
        %v798 = vrcp.pop %v768
        %v799 = vmul.f32 %v768, %v798
        %v800 = vsub.f32 1.0, %v799
        %v801 = vmul.f32 %v798, %v800
        %v802 = vadd.f32 %v798, %v801
        %vm803 = vweird.f32 %v768
        %vm804 = vweird.f32 %v798
        %vm805 = vmor %vm803, %vm804
        %v806 = vsel %vm805, %v798, %v802
        %v807 = vand.u32 2147483647, %v768
        %vm808 = vcmp.eq.f32.partialorder %v807, 8.507059e+37
        %v809 = vand.u32 %v768, 2147483648
        %v810 = vor.u32 1.1754944e-38, %v809
        %v811 = vsel %vm808, %v810, %v806
        %v812 = vmul.f32 %v702, %v811
        %v813 = vrcp.pop %v769
        %v814 = vmul.f32 %v769, %v813
        %v815 = vsub.f32 1.0, %v814
        %v816 = vmul.f32 %v813, %v815
        %v817 = vadd.f32 %v813, %v816
        %vm818 = vweird.f32 %v769
        %vm819 = vweird.f32 %v813
        %vm820 = vmor %vm818, %vm819
        %v821 = vsel %vm820, %v813, %v817
        %v822 = vand.u32 2147483647, %v769
        %vm823 = vcmp.eq.f32.partialorder %v822, 8.507059e+37
        %v824 = vand.u32 %v769, 2147483648
        %v825 = vor.u32 1.1754944e-38, %v824
        %v826 = vsel %vm823, %v825, %v821
        %v827 = vmul.f32 %v704, %v826
        %v828 = vrcp.pop %v770
        %v829 = vmul.f32 %v770, %v828
        %v830 = vsub.f32 1.0, %v829
        %v831 = vmul.f32 %v828, %v830
        %v832 = vadd.f32 %v828, %v831
        %vm833 = vweird.f32 %v770
        %vm834 = vweird.f32 %v828
        %vm835 = vmor %vm833, %vm834
        %v836 = vsel %vm835, %v828, %v832
        %v837 = vand.u32 2147483647, %v770
        %vm838 = vcmp.eq.f32.partialorder %v837, 8.507059e+37
        %v839 = vand.u32 %v770, 2147483648
        %v840 = vor.u32 1.1754944e-38, %v839
        %v841 = vsel %vm838, %v840, %v836
        %v842 = vmul.f32 %v706, %v841
        %v843 = vrcp.pop %v771
        %v844 = vmul.f32 %v771, %v843
        %v845 = vsub.f32 1.0, %v844
        %v846 = vmul.f32 %v843, %v845
        %v847 = vadd.f32 %v843, %v846
        %vm848 = vweird.f32 %v771
        %vm849 = vweird.f32 %v843
        %vm850 = vmor %vm848, %vm849
        %v851 = vsel %vm850, %v843, %v847
        %v852 = vand.u32 2147483647, %v771
        %vm853 = vcmp.eq.f32.partialorder %v852, 8.507059e+37
        %v854 = vand.u32 %v771, 2147483648
        %v855 = vor.u32 1.1754944e-38, %v854
        %v856 = vsel %vm853, %v855, %v851
        %v857 = vmul.f32 %v708, %v856
        %v858 = vrcp.pop %v772
        %v859 = vmul.f32 %v772, %v858
        %v860 = vsub.f32 1.0, %v859
        %v861 = vmul.f32 %v858, %v860
        %v862 = vadd.f32 %v858, %v861
        %vm863 = vweird.f32 %v772
        %vm864 = vweird.f32 %v858
        %vm865 = vmor %vm863, %vm864
        %v866 = vsel %vm865, %v858, %v862
        %v867 = vand.u32 2147483647, %v772
        %vm868 = vcmp.eq.f32.partialorder %v867, 8.507059e+37
        %v869 = vand.u32 %v772, 2147483648
        %v870 = vor.u32 1.1754944e-38, %v869
        %v871 = vsel %vm868, %v870, %v866
        %v872 = vmul.f32 %v710, %v871
        %v873 = vrcp.pop %v773
        %v874 = vmul.f32 %v773, %v873
        %v875 = vsub.f32 1.0, %v874
        %v876 = vmul.f32 %v873, %v875
        %v877 = vadd.f32 %v873, %v876
        %vm878 = vweird.f32 %v773
        %vm879 = vweird.f32 %v873
        %vm880 = vmor %vm878, %vm879
        %v881 = vsel %vm880, %v873, %v877
        %v882 = vand.u32 2147483647, %v773
        %vm883 = vcmp.eq.f32.partialorder %v882, 8.507059e+37
        %v884 = vand.u32 %v773, 2147483648
        %v885 = vor.u32 1.1754944e-38, %v884
        %v886 = vsel %vm883, %v885, %v881
        %v887 = vmul.f32 %v712, %v886
        %v888 = vrcp.pop %v774
        %v889 = vmul.f32 %v774, %v888
        %v890 = vsub.f32 1.0, %v889
        %v891 = vmul.f32 %v888, %v890
        %v892 = vadd.f32 %v888, %v891
        %vm893 = vweird.f32 %v774
        %vm894 = vweird.f32 %v888
        %vm895 = vmor %vm893, %vm894
        %v896 = vsel %vm895, %v888, %v892
        %v897 = vand.u32 2147483647, %v774
        %vm898 = vcmp.eq.f32.partialorder %v897, 8.507059e+37
        %v899 = vand.u32 %v774, 2147483648
        %v900 = vor.u32 1.1754944e-38, %v899
        %v901 = vsel %vm898, %v900, %v896
        %v902 = vmul.f32 %v714, %v901
        %904 = vset.pattern.permute.xlu0 0
        %905 = vperm.xlu0 %904, %v797
        %v906 = vpop.permute.xlu0 %905
        %909 = vset.pattern.permute.xlu0 0
        %910 = vperm.xlu0 %909, %v812
        %v911 = vpop.permute.xlu0 %910
        %914 = vset.pattern.permute.xlu0 0
        %915 = vperm.xlu0 %914, %v827
        %v916 = vpop.permute.xlu0 %915
        %919 = vset.pattern.permute.xlu0 0
        %920 = vperm.xlu0 %919, %v842
        %v921 = vpop.permute.xlu0 %920
        %924 = vset.pattern.permute.xlu0 0
        %925 = vperm.xlu0 %924, %v857
        %v926 = vpop.permute.xlu0 %925
        %929 = vset.pattern.permute.xlu0 0
        %930 = vperm.xlu0 %929, %v872
        %v931 = vpop.permute.xlu0 %930
        %934 = vset.pattern.permute.xlu0 0
        %935 = vperm.xlu0 %934, %v887
        %v936 = vpop.permute.xlu0 %935
        %939 = vset.pattern.permute.xlu0 0
        %940 = vperm.xlu0 %939, %v902
        %v941 = vpop.permute.xlu0 %940
        %v943 = vmul.f32 %v410, %v906
        %v944 = vmul.f32 %v411, %v911
        %v945 = vmul.f32 %v412, %v916
        %v946 = vmul.f32 %v413, %v921
        %v947 = vmul.f32 %v414, %v926
        %v948 = vmul.f32 %v415, %v931
        %v949 = vmul.f32 %v416, %v936
        %v950 = vmul.f32 %v417, %v941
        %v951 = vsel %vm422, %v943, 0.0
        %v952 = vrot.slane %v951, 4
        %v953 = vadd.f32 %v951, %v952
        %v954 = vrot.slane %v953, 2
        %v955 = vadd.f32 %v953, %v954
        %v956 = vrot.slane %v955, 1
        %v957 = vadd.f32 %v955, %v956
        %v958 = vsel %vm422, %v944, 0.0
        %v959 = vrot.slane %v958, 4
        %v960 = vadd.f32 %v958, %v959
        %v961 = vrot.slane %v960, 2
        %v962 = vadd.f32 %v960, %v961
        %v963 = vrot.slane %v962, 1
        %v964 = vadd.f32 %v962, %v963
        %v965 = vsel %vm422, %v945, 0.0
        %v966 = vrot.slane %v965, 4
        %v967 = vadd.f32 %v965, %v966
        %v968 = vrot.slane %v967, 2
        %v969 = vadd.f32 %v967, %v968
        %v970 = vrot.slane %v969, 1
        %v971 = vadd.f32 %v969, %v970
        %v972 = vsel %vm422, %v946, 0.0
        %v973 = vrot.slane %v972, 4
        %v974 = vadd.f32 %v972, %v973
        %v975 = vrot.slane %v974, 2
        %v976 = vadd.f32 %v974, %v975
        %v977 = vrot.slane %v976, 1
        %v978 = vadd.f32 %v976, %v977
        %v979 = vsel %vm422, %v947, 0.0
        %v980 = vrot.slane %v979, 4
        %v981 = vadd.f32 %v979, %v980
        %v982 = vrot.slane %v981, 2
        %v983 = vadd.f32 %v981, %v982
        %v984 = vrot.slane %v983, 1
        %v985 = vadd.f32 %v983, %v984
        %v986 = vsel %vm422, %v948, 0.0
        %v987 = vrot.slane %v986, 4
        %v988 = vadd.f32 %v986, %v987
        %v989 = vrot.slane %v988, 2
        %v990 = vadd.f32 %v988, %v989
        %v991 = vrot.slane %v990, 1
        %v992 = vadd.f32 %v990, %v991
        %v993 = vsel %vm422, %v949, 0.0
        %v994 = vrot.slane %v993, 4
        %v995 = vadd.f32 %v993, %v994
        %v996 = vrot.slane %v995, 2
        %v997 = vadd.f32 %v995, %v996
        %v998 = vrot.slane %v997, 1
        %v999 = vadd.f32 %v997, %v998
        %v1000 = vsel %vm422, %v950, 0.0
        %v1001 = vrot.slane %v1000, 4
        %v1002 = vadd.f32 %v1000, %v1001
        %v1003 = vrot.slane %v1002, 2
        %v1004 = vadd.f32 %v1002, %v1003
        %v1005 = vrot.slane %v1004, 1
        %v1006 = vadd.f32 %v1004, %v1005
        %v1015 = vsel %vm655, %v964, %v957
        %v1016 = vsel %vm657, %v971, %v1015
        %v1017 = vsel %vm659, %v978, %v1016
        %v1018 = vsel %vm661, %v985, %v1017
        %v1019 = vsel %vm663, %v992, %v1018
        %v1020 = vsel %vm665, %v999, %v1019
        %v1021 = vsel %vm667, %v1006, %v1020
        %1023 = vst.msk [vmem:[%s398] sm:$0xff] %vm422, %v1021
        %v1024 = vperm.slane %v906, %v646
        %v1025 = vperm.slane %v911, %v646
        %v1026 = vperm.slane %v916, %v646
        %v1027 = vperm.slane %v921, %v646
        %v1028 = vperm.slane %v926, %v646
        %v1029 = vperm.slane %v931, %v646
        %v1030 = vperm.slane %v936, %v646
        %v1031 = vperm.slane %v941, %v646
        %v1032 = vsel %vm655, %v1025, %v1024
        %v1033 = vsel %vm657, %v1026, %v1032
        %v1034 = vsel %vm659, %v1027, %v1033
        %v1035 = vsel %vm661, %v1028, %v1034
        %v1036 = vsel %vm663, %v1029, %v1035
        %v1037 = vsel %vm665, %v1030, %v1036
        %v1038 = vsel %vm667, %v1031, %v1037
        %1040 = vst.msk [vmem:[%s409] sm:$0xff] %vm670, %v1038
        %s1041 = sand.u32 %s195, 1
        %s1042 = scalar_lea.sflag [#allocation4], %s1041
        %s1043 = sand.u32 %s195, 1
        %s1044 = smul.addr %s1043, 8
        %s1045 = scalar_lea.vmem [#allocation10], %s1044
        %p1046 = scmp.lt.s32.totalorder %s30, 1
        %s1047 = scalar_select %p1046, %s30, 1
        %s1048 = smul.addr %s1047, 8
        %s1049 = scalar_lea.vmem %s8, %s1048
        // Predicated region
        $region65: #{tpu_custom_call.1} parent=47 // pred_check
          %p1050 = pneg %p205
        $region66: #{tpu_custom_call.1} parent=47 // pred_check_branch
          %1052 = sbr.rel (%p1050) target = $region68
        $region67: #{tpu_custom_call.1} parent=47 // pred_region
          %1054 = vsyncadd %s1042, 0
          %s1055 = smul.addr %s30, 8
          %s1056 = scalar_lea.hbm %s7, %s1055
          %s1058 = sshll.u32 %s1045, 4
          %s1059 = int_to_ptr.vmem [resolvable:$true] %s1058
          %s1060 = sshll.u32 %s1056, 4
          %s1061 = int_to_ptr.hbm [resolvable:$true] %s1060
          %1063 = dma.vmem_to_hbm [thread:$0]  %s1059, 128, %s1061, %s1042
        $region68: #{tpu_custom_call.1} parent=47 // pred_fallthru
          _
        // Predicated region
        $region69: #{tpu_custom_call.1} parent=47 // pred_check
          %p1064 = pneg %p231
        $region70: #{tpu_custom_call.1} parent=47 // pred_check_branch
          %1066 = sbr.rel (%p1064) target = $region72
        $region71: #{tpu_custom_call.1} parent=47 // pred_region
          _
        $region72: #{tpu_custom_call.1} parent=47 // pred_fallthru
          _
      $region48: #{tpu_custom_call.1} parent=5 // pred_fallthru
        _
      %p1067 = scmp.le.s32.totalorder 2, %s25
      // Predicated region
      $region73: #{tpu_custom_call.1} parent=5 // pred_check
        %p1068 = pneg %p1067
      $region74: #{tpu_custom_call.1} parent=5 // pred_check_branch
        %1070 = sbr.rel (%p1068) target = $region76
      $region75: #{tpu_custom_call.1} parent=5 // pred_region
        %s1071 = ssub.s32 %s25, 2
        // Predicated region
        $region77: #{tpu_custom_call.1} parent=75 // pred_check
          %p1072 = pneg %p211
        $region78: #{tpu_custom_call.1} parent=75 // pred_check_branch
          %1074 = sbr.rel (%p1072) target = $region80
        $region79: #{tpu_custom_call.1} parent=75 // pred_region
          %s1075 = sand.u32 %s196, 1
          %s1076 = scalar_lea.sflag [#allocation4], %s1075
          %s1077 = sand.u32 %s196, 1
          %s1078 = smul.addr %s1077, 8
          %s1079 = scalar_lea.vmem [#allocation10], %s1078
          %1081 = dma.done %s1076, 128
        $region80: #{tpu_custom_call.1} parent=75 // pred_fallthru
          _
        // Predicated region
        $region81: #{tpu_custom_call.1} parent=75 // pred_check
          %p1082 = pneg %p237
        $region82: #{tpu_custom_call.1} parent=75 // pred_check_branch
          %1084 = sbr.rel (%p1082) target = $region84
        $region83: #{tpu_custom_call.1} parent=75 // pred_region
          %p1085 = scmp.lt.s32.totalorder %s31, 1
          %s1086 = scalar_select %p1085, %s31, 1
          %s1087 = smul.addr %s1086, 8
          %s1088 = scalar_lea.vmem %s8, %s1087
        $region84: #{tpu_custom_call.1} parent=75 // pred_fallthru
          _
      $region76: #{tpu_custom_call.1} parent=5 // pred_fallthru
        _
    $region6: #{tpu_custom_call.1} parent=1 // loop_footer
      %s29 = sadd.s32 1, %s25
    $region7: #{tpu_custom_call.1} parent=1 // loop_footer_branch
      %24 = sbr.rel target = $region3
    $region8: #{tpu_custom_call.1} parent=1 // loop_exit
      _
    %1089 = vsyncpa [#allocation3], 1
    %s1090 = scalar_lea.sflag [#allocation3], 1
    %1091 = vsyncpa %s1090, 1
    %1092 = vsyncpa [#allocation6], 1
    %s1093 = scalar_lea.sflag [#allocation6], 1
    %1094 = vsyncpa %s1093, 1
    %1095 = vsyncpa [#allocation9], 1
    %1096 = vsyncpa [#allocation4], 1
    %s1097 = scalar_lea.sflag [#allocation4], 1
    %1098 = vsyncpa %s1097, 1

</llo_original>
